<compile_context>
chip_gen: v5e
topology: v5e:2x2
jax: 0.10.0
libtpu: 0.0.40
codegen_flags: <defaults>
</compile_context>

<pallas_src>
import functools

import jax
import jax.numpy as jnp
from jax.experimental import pallas as pl
from jax.experimental.pallas import tpu as pltpu


_LANE = 128


def _round_up(x, m):
    return ((x + m - 1) // m) * m


# ---------------------------------------------------------------------------
# Fused loss kernel: streamed mel MSE + resident pitch/energy/duration L1.
# ---------------------------------------------------------------------------
def _loss_kernel(mel_ref, melt_ref, p_ref, pt_ref, e_ref, et_ref, d_ref, dt_ref,
                 out_ref, acc_ref, *, rows, mel_count, needs_mask):
    i = pl.program_id(0)
    tm, m = mel_ref.shape

    @pl.when(i == 0)
    def _():
        acc_ref[...] = jnp.zeros_like(acc_ref)

    diff = mel_ref[...].astype(jnp.float32) - melt_ref[...].astype(jnp.float32)
    sq = diff * diff

    if needs_mask:
        # Rows past the true end of the array hold unspecified data in the
        # partial boundary block: zero their contribution.
        row_ids = jax.lax.broadcasted_iota(jnp.int32, (tm, m), 0)
        sq = jnp.where(i * tm + row_ids < rows, sq, jnp.float32(0.0))

    if tm % 8 == 0:
        # Grouped sublane-tile sum: pure VPU adds into an (8, m) vreg-group
        # accumulator, no per-step cross-sublane reduce, unmasked store.
        acc_ref[...] += jnp.sum(sq.reshape(tm // 8, 8, m), axis=0)
    else:
        # Degenerate tiny-input path (rows < 8); only row 0 accumulates.
        acc_ref[0:1, :] += jnp.sum(sq, axis=0, keepdims=True)

    @pl.when(i == pl.num_programs(0) - 1)
    def _():
        def l1(a_ref, b_ref):
            d = a_ref[...].astype(jnp.float32) - b_ref[...].astype(jnp.float32)
            return jnp.mean(jnp.abs(d))

        out_ref[0] = jnp.sum(acc_ref[...]) / jnp.float32(mel_count)  # mel MSE
        out_ref[1] = l1(p_ref, pt_ref)   # pitch L1
        out_ref[2] = l1(e_ref, et_ref)   # energy L1
        out_ref[3] = l1(d_ref, dt_ref)   # duration L1


# ---------------------------------------------------------------------------
# Public wrapper: matches FastSpeech2Loss.forward signature / return order.
# ---------------------------------------------------------------------------
def fastspeech2_loss(mel, mel_target, energy, energy_target,
                     duration, duration_target, pitch, pitch_target,
                     *, block_vmem_bytes=4 * 1024 * 1024):
    assert mel.shape == mel_target.shape
    m = mel.shape[-1]
    rows = mel.size // m

    # Free, contiguous views -- no pad / repack copies in HBM.
    mel2 = mel.reshape(rows, m)
    melt2 = mel_target.reshape(rows, m)

    # Row-tile size: target ~block_vmem_bytes of VMEM per (tm, m) block,
    # accounting for lane padding of the minor dim, multiple of 8 sublanes.
    lanes = _round_up(m, _LANE)
    bytes_per_row = lanes * mel.dtype.itemsize
    tm = max(8, (block_vmem_bytes // bytes_per_row) // 8 * 8)
    if rows >= 8:
        tm = min(tm, (rows // 8) * 8)   # keep block start in-bounds
    else:
        tm = rows                       # block == full dim (degenerate case)
    num_tiles = pl.cdiv(rows, tm)
    needs_mask = (num_tiles * tm != rows)

    mel_spec = pl.BlockSpec((tm, m), lambda i: (i, 0))

    def _resident_spec(x):
        nd = x.ndim
        return pl.BlockSpec(x.shape, lambda i: (0,) * nd)  # DMA'd once, stays resident

    small = (pitch, pitch_target, energy, energy_target, duration, duration_target)

    n_mel = mel.size
    flops = 3 * n_mel + 2 * sum(int(a.size) for a in small)
    bytes_accessed = (int(mel2.size) * mel2.dtype.itemsize
                      + int(melt2.size) * melt2.dtype.itemsize
                      + sum(int(a.size) * a.dtype.itemsize for a in small) + 16)

    kernel = functools.partial(_loss_kernel, rows=rows, mel_count=n_mel,
                               needs_mask=needs_mask)

    out = pl.pallas_call(
        kernel,
        out_shape=jax.ShapeDtypeStruct((4,), jnp.float32),
        grid_spec=pltpu.PrefetchScalarGridSpec(
            num_scalar_prefetch=0,
            grid=(num_tiles,),
            in_specs=[mel_spec, mel_spec] + [_resident_spec(a) for a in small],
            out_specs=pl.BlockSpec(memory_space=pltpu.MemorySpace.SMEM),
            scratch_shapes=[pltpu.VMEM((8, m), jnp.float32)],
        ),
        compiler_params=pltpu.CompilerParams(
            dimension_semantics=("arbitrary",),
            # 2 mel inputs x 2 pipeline buffers x ~4 MiB + resident smalls +
            # accumulator stays well under 32 MiB on every generation.
            vmem_limit_bytes=32 * 1024 * 1024),
        cost_estimate=pl.CostEstimate(
            flops=flops, transcendentals=0, bytes_accessed=bytes_accessed),
    )(mel2, melt2, *small)

    return out[0], out[1], out[2], out[3]


def _reference(mel, mel_target, energy, energy_target,
               duration, duration_target, pitch, pitch_target):
    mel_loss = jnp.mean((mel.astype(jnp.float32)
                         - mel_target.astype(jnp.float32)) ** 2)
    p_loss = jnp.mean(jnp.abs(pitch.astype(jnp.float32)
                              - pitch_target.astype(jnp.float32)))
    e_loss = jnp.mean(jnp.abs(energy.astype(jnp.float32)
                              - energy_target.astype(jnp.float32)))
    d_loss = jnp.mean(jnp.abs(duration.astype(jnp.float32)
                              - duration_target.astype(jnp.float32)))
    return mel_loss, p_loss, e_loss, d_loss


if __name__ == "__main__":
    key = jax.random.PRNGKey(0)

    def run_case(B, T, M, mel_dtype):
        ks = jax.random.split(key, 8)
        mel = jax.random.normal(ks[0], (B, T, M), jnp.float32).astype(mel_dtype)
        mel_target = jax.random.normal(ks[1], (B, T, M), jnp.float32).astype(mel_dtype)
        energy = jax.random.normal(ks[2], (B, T), jnp.float32)
        energy_target = jax.random.normal(ks[3], (B, T), jnp.float32)
        duration = jax.random.normal(ks[4], (B, T), jnp.float32)
        duration_target = jax.random.randint(ks[5], (B, T), 0, 10, jnp.int32)
        pitch = jax.random.normal(ks[6], (B, T), jnp.float32)
        pitch_target = jax.random.normal(ks[7], (B, T), jnp.float32)

        got = fastspeech2_loss(mel, mel_target, energy, energy_target,
                               duration, duration_target, pitch, pitch_target)
        got = jax.block_until_ready(got)
        want = _reference(mel, mel_target, energy, energy_target,
                          duration, duration_target, pitch, pitch_target)
        for g, w in zip(got, want):
            assert jnp.allclose(g, w, rtol=1e-5, atol=1e-5), (g, w)

    # Case 1: small shapes implied by the module (rows divide the tile evenly).
    run_case(B=2, T=8, M=32, mel_dtype=jnp.float32)
    # Case 2: ragged row count + non-lane-multiple mel dim + bf16 mels
    # (exercises the in-kernel tail mask and native-dtype pass-through).
    run_case(B=3, T=17, M=80, mel_dtype=jnp.bfloat16)

    print("KERNEL_OK")
</pallas_src>

<mosaic_0001>
module attributes {stable_mosaic.version = 11 : i64} {
  func.func @_loss_kernel(%arg0: i32, %arg1: memref<16x32xf32, #tpu.memory_space<vmem>>, %arg2: memref<16x32xf32, #tpu.memory_space<vmem>>, %arg3: memref<2x8xf32, #tpu.memory_space<vmem>>, %arg4: memref<2x8xf32, #tpu.memory_space<vmem>>, %arg5: memref<2x8xf32, #tpu.memory_space<vmem>>, %arg6: memref<2x8xf32, #tpu.memory_space<vmem>>, %arg7: memref<2x8xf32, #tpu.memory_space<vmem>>, %arg8: memref<2x8xi32, #tpu.memory_space<vmem>>, %arg9: memref<4xf32, #tpu.memory_space<smem>>, %arg10: memref<8x32xf32, #tpu.memory_space<vmem>>) attributes {dimension_semantics = [#tpu.dimension_semantics<arbitrary>], iteration_bounds = array<i64: 1>, scalar_prefetch = 0 : i64, scratch_operands = 1 : i64, tpu.core_type = #tpu.core_type<tc>, window_params = [{transform_indices = @transform_0, window_bounds = array<i64: 16, 32>}, {transform_indices = @transform_1, window_bounds = array<i64: 16, 32>}, {pipeline_mode = #tpu.pipeline_mode<synchronous>, transform_indices = @transform_2, window_bounds = array<i64: 2, 8>}, {pipeline_mode = #tpu.pipeline_mode<synchronous>, transform_indices = @transform_3, window_bounds = array<i64: 2, 8>}, {pipeline_mode = #tpu.pipeline_mode<synchronous>, transform_indices = @transform_4, window_bounds = array<i64: 2, 8>}, {pipeline_mode = #tpu.pipeline_mode<synchronous>, transform_indices = @transform_5, window_bounds = array<i64: 2, 8>}, {pipeline_mode = #tpu.pipeline_mode<synchronous>, transform_indices = @transform_6, window_bounds = array<i64: 2, 8>}, {pipeline_mode = #tpu.pipeline_mode<synchronous>, transform_indices = @transform_7, window_bounds = array<i64: 2, 8>}, {transform_indices = @transform_8, window_bounds = array<i64: 4>}]} {
    %c0_i32 = arith.constant 0 : i32
    %0 = arith.cmpi eq, %arg0, %c0_i32 : i32
    %1 = arith.extui %0 : i1 to i32
    %c0_i32_0 = arith.constant 0 : i32
    %2 = arith.cmpi ne, %1, %c0_i32_0 : i32
    scf.if %2 {
      %cst_10 = arith.constant 0.000000e+00 : f32
      %15 = vector.broadcast %cst_10 : f32 to vector<8x32xf32>
      %c0_11 = arith.constant 0 : index
      %c0_12 = arith.constant 0 : index
      %16 = vector.load %arg10[%c0_11, %c0_12] : memref<8x32xf32, #tpu.memory_space<vmem>>, vector<8x32xf32>
      tpu.vector_store %arg10[%c0_11, %c0_12], %15 {strides = array<i32>} : memref<8x32xf32, #tpu.memory_space<vmem>>, vector<8x32xf32>,
    } else {
    }
    %c0 = arith.constant 0 : index
    %c0_1 = arith.constant 0 : index
    %3 = vector.load %arg1[%c0, %c0_1] : memref<16x32xf32, #tpu.memory_space<vmem>>, vector<16x32xf32>
    %c0_2 = arith.constant 0 : index
    %c0_3 = arith.constant 0 : index
    %4 = vector.load %arg2[%c0_2, %c0_3] : memref<16x32xf32, #tpu.memory_space<vmem>>, vector<16x32xf32>
    %5 = arith.subf %3, %4 : vector<16x32xf32>
    %6 = arith.mulf %5, %5 : vector<16x32xf32>
    %c0_4 = arith.constant 0 : index
    %c0_5 = arith.constant 0 : index
    %7 = vector.load %arg10[%c0_4, %c0_5] : memref<8x32xf32, #tpu.memory_space<vmem>>, vector<8x32xf32>
    %8 = vector.shape_cast %6 : vector<16x32xf32> to vector<2x8x32xf32>
    %cst = arith.constant dense<0.000000e+00> : vector<8x32xf32>
    %9 = vector.multi_reduction <add>, %8, %cst [0] : vector<2x8x32xf32> to vector<8x32xf32>
    %10 = arith.addf %7, %9 : vector<8x32xf32>
    %c0_6 = arith.constant 0 : index
    %c0_7 = arith.constant 0 : index
    %11 = vector.load %arg10[%c0_6, %c0_7] : memref<8x32xf32, #tpu.memory_space<vmem>>, vector<8x32xf32>
    tpu.vector_store %arg10[%c0_6, %c0_7], %10 {strides = array<i32>} : memref<8x32xf32, #tpu.memory_space<vmem>>, vector<8x32xf32>,
    %c0_i32_8 = arith.constant 0 : i32
    %12 = arith.cmpi eq, %arg0, %c0_i32_8 : i32
    %13 = arith.extui %12 : i1 to i32
    %c0_i32_9 = arith.constant 0 : i32
    %14 = arith.cmpi ne, %13, %c0_i32_9 : i32
    scf.if %14 {
      %c0_10 = arith.constant 0 : index
      %c0_11 = arith.constant 0 : index
      %15 = vector.load %arg10[%c0_10, %c0_11] : memref<8x32xf32, #tpu.memory_space<vmem>>, vector<8x32xf32>
      %16 = vector.shape_cast %15 : vector<8x32xf32> to vector<1x8x32xf32>
      %cst_12 = arith.constant dense<0.000000e+00> : vector<1xf32>
      %17 = vector.multi_reduction <add>, %16, %cst_12 [1, 2] : vector<1x8x32xf32> to vector<1xf32>
      %18 = vector.shape_cast %17 : vector<1xf32> to vector<1x1x1xf32>
      %19 = vector.extract %18[0, 0, 0] : f32 from vector<1x1x1xf32>
      %cst_13 = arith.constant 5.120000e+02 : f32
      %20 = arith.divf %19, %cst_13 : f32
      %c0_14 = arith.constant 0 : index
      %21 = memref.load %arg9[%c0_14] : memref<4xf32, #tpu.memory_space<smem>>
      memref.store %20, %arg9[%c0_14] : memref<4xf32, #tpu.memory_space<smem>>
      %c0_15 = arith.constant 0 : index
      %c0_16 = arith.constant 0 : index
      %22 = vector.load %arg3[%c0_15, %c0_16] : memref<2x8xf32, #tpu.memory_space<vmem>>, vector<2x8xf32>
      %c0_17 = arith.constant 0 : index
      %c0_18 = arith.constant 0 : index
      %23 = vector.load %arg4[%c0_17, %c0_18] : memref<2x8xf32, #tpu.memory_space<vmem>>, vector<2x8xf32>
      %24 = arith.subf %22, %23 : vector<2x8xf32>
      %25 = math.absf %24 : vector<2x8xf32>
      %26 = vector.shape_cast %25 : vector<2x8xf32> to vector<1x2x8xf32>
      %cst_19 = arith.constant dense<0.000000e+00> : vector<1xf32>
      %27 = vector.multi_reduction <add>, %26, %cst_19 [1, 2] : vector<1x2x8xf32> to vector<1xf32>
      %28 = vector.shape_cast %27 : vector<1xf32> to vector<1x1x1xf32>
      %29 = vector.extract %28[0, 0, 0] : f32 from vector<1x1x1xf32>
      %cst_20 = arith.constant 1.600000e+01 : f32
      %30 = arith.divf %29, %cst_20 : f32
      %c1 = arith.constant 1 : index
      %31 = memref.load %arg9[%c1] : memref<4xf32, #tpu.memory_space<smem>>
      memref.store %30, %arg9[%c1] : memref<4xf32, #tpu.memory_space<smem>>
      %c0_21 = arith.constant 0 : index
      %c0_22 = arith.constant 0 : index
      %32 = vector.load %arg5[%c0_21, %c0_22] : memref<2x8xf32, #tpu.memory_space<vmem>>, vector<2x8xf32>
      %c0_23 = arith.constant 0 : index
      %c0_24 = arith.constant 0 : index
      %33 = vector.load %arg6[%c0_23, %c0_24] : memref<2x8xf32, #tpu.memory_space<vmem>>, vector<2x8xf32>
      %34 = arith.subf %32, %33 : vector<2x8xf32>
      %35 = math.absf %34 : vector<2x8xf32>
      %36 = vector.shape_cast %35 : vector<2x8xf32> to vector<1x2x8xf32>
      %cst_25 = arith.constant dense<0.000000e+00> : vector<1xf32>
      %37 = vector.multi_reduction <add>, %36, %cst_25 [1, 2] : vector<1x2x8xf32> to vector<1xf32>
      %38 = vector.shape_cast %37 : vector<1xf32> to vector<1x1x1xf32>
      %39 = vector.extract %38[0, 0, 0] : f32 from vector<1x1x1xf32>
      %cst_26 = arith.constant 1.600000e+01 : f32
      %40 = arith.divf %39, %cst_26 : f32
      %c2 = arith.constant 2 : index
      %41 = memref.load %arg9[%c2] : memref<4xf32, #tpu.memory_space<smem>>
      memref.store %40, %arg9[%c2] : memref<4xf32, #tpu.memory_space<smem>>
      %c0_27 = arith.constant 0 : index
      %c0_28 = arith.constant 0 : index
      %42 = vector.load %arg7[%c0_27, %c0_28] : memref<2x8xf32, #tpu.memory_space<vmem>>, vector<2x8xf32>
      %c0_29 = arith.constant 0 : index
      %c0_30 = arith.constant 0 : index
      %43 = vector.load %arg8[%c0_29, %c0_30] : memref<2x8xi32, #tpu.memory_space<vmem>>, vector<2x8xi32>
      %44 = arith.sitofp %43 : vector<2x8xi32> to vector<2x8xf32>
      %45 = arith.subf %42, %44 : vector<2x8xf32>
      %46 = math.absf %45 : vector<2x8xf32>
      %47 = vector.shape_cast %46 : vector<2x8xf32> to vector<1x2x8xf32>
      %cst_31 = arith.constant dense<0.000000e+00> : vector<1xf32>
      %48 = vector.multi_reduction <add>, %47, %cst_31 [1, 2] : vector<1x2x8xf32> to vector<1xf32>
      %49 = vector.shape_cast %48 : vector<1xf32> to vector<1x1x1xf32>
      %50 = vector.extract %49[0, 0, 0] : f32 from vector<1x1x1xf32>
      %cst_32 = arith.constant 1.600000e+01 : f32
      %51 = arith.divf %50, %cst_32 : f32
      %c3 = arith.constant 3 : index
      %52 = memref.load %arg9[%c3] : memref<4xf32, #tpu.memory_space<smem>>
      memref.store %51, %arg9[%c3] : memref<4xf32, #tpu.memory_space<smem>>
    } else {
    }
    return
  }
  func.func @transform_0(%arg0: i32) -> (i32, i32) {
    %c0_i32 = arith.constant 0 : i32
    %c0_i32_0 = arith.constant 0 : i32
    return %arg0, %c0_i32 : i32, i32
  }
  func.func @transform_1(%arg0: i32) -> (i32, i32) {
    %c0_i32 = arith.constant 0 : i32
    %c0_i32_0 = arith.constant 0 : i32
    return %arg0, %c0_i32 : i32, i32
  }
  func.func @transform_2(%arg0: i32) -> (i32, i32) {
    %c0_i32 = arith.constant 0 : i32
    %c0_i32_0 = arith.constant 0 : i32
    %c0_i32_1 = arith.constant 0 : i32
    return %c0_i32, %c0_i32_0 : i32, i32
  }
  func.func @transform_3(%arg0: i32) -> (i32, i32) {
    %c0_i32 = arith.constant 0 : i32
    %c0_i32_0 = arith.constant 0 : i32
    %c0_i32_1 = arith.constant 0 : i32
    return %c0_i32, %c0_i32_0 : i32, i32
  }
  func.func @transform_4(%arg0: i32) -> (i32, i32) {
    %c0_i32 = arith.constant 0 : i32
    %c0_i32_0 = arith.constant 0 : i32
    %c0_i32_1 = arith.constant 0 : i32
    return %c0_i32, %c0_i32_0 : i32, i32
  }
  func.func @transform_5(%arg0: i32) -> (i32, i32) {
    %c0_i32 = arith.constant 0 : i32
    %c0_i32_0 = arith.constant 0 : i32
    %c0_i32_1 = arith.constant 0 : i32
    return %c0_i32, %c0_i32_0 : i32, i32
  }
  func.func @transform_6(%arg0: i32) -> (i32, i32) {
    %c0_i32 = arith.constant 0 : i32
    %c0_i32_0 = arith.constant 0 : i32
    %c0_i32_1 = arith.constant 0 : i32
    return %c0_i32, %c0_i32_0 : i32, i32
  }
  func.func @transform_7(%arg0: i32) -> (i32, i32) {
    %c0_i32 = arith.constant 0 : i32
    %c0_i32_0 = arith.constant 0 : i32
    %c0_i32_1 = arith.constant 0 : i32
    return %c0_i32, %c0_i32_0 : i32, i32
  }
  func.func @transform_8(%arg0: i32) -> i32 {
    %c0_i32 = arith.constant 0 : i32
    %c0_i32_0 = arith.constant 0 : i32
    return %c0_i32 : i32
  }
}

</mosaic_0001>

<llo_original>
// kernel: tpu_custom_call.1
$region0: #{tpu_custom_call.1}
  #allocation0 [shape = 'u32[]', space=smem, size = 0x4, offset = 0x4, fixed_abs, tag = 'smem constant byte address 0x4 - core index']
  #allocation1 [shape = 'u32[72,128]{1,0:T(1,128)}', space=vmem, size = 0x9000, scoped, tag = 'internal scratch']
  #allocation2 [shape = 'f32[8,32]{1,0:T(8,128)}', space=vmem, size = 0x1000, scoped, tag = 'scratch operand']
  %s0 = inlined_call_operand.hbm [shape: f32[16,32], index: 0, kind: input, shape index: {}]
  %s1 = inlined_call_operand.hbm [shape: f32[16,32], index: 1, kind: input, shape index: {}]
  %s2 = inlined_call_operand.hbm [shape: f32[2,8], index: 2, kind: input, shape index: {}]
  %s3 = inlined_call_operand.vmem [shape: f32[2,8], index: 3, kind: input, shape index: {}]
  %s4 = inlined_call_operand.hbm [shape: f32[2,8], index: 4, kind: input, shape index: {}]
  %s5 = inlined_call_operand.vmem [shape: f32[2,8], index: 5, kind: input, shape index: {}]
  %s6 = inlined_call_operand.hbm [shape: f32[2,8], index: 6, kind: input, shape index: {}]
  %s7 = inlined_call_operand.vmem [shape: s32[2,8], index: 7, kind: input, shape index: {}]
  %s8 = inlined_call_operand.hbm [shape: f32[4], index: 8, kind: output, shape index: {}]
  %s9 = sld [smem:[#allocation0]]
  $region70: #{tpu_custom_call.1} parent=0
    _
  %s11 = ssub.s32 1, %s9
  %s12 = scalar_select 0, %s11, %s9
  $region1: #{tpu_custom_call.1} parent=0
    #allocation3 [shape = 'u8[8192]{0}', space=vmem, size = 0x2000, scoped, tag = 'input window, operand 0, single buffered']
    #allocation4 [shape = 's32[1]{0}', space=sflag, size = 0x4, scoped, tag = 'scoped memory for tpu_custom_call.1']
    #allocation5 [shape = 's32[1]{0}', space=sflag, size = 0x4, scoped, tag = 'scoped memory for tpu_custom_call.1']
    #allocation6 [shape = 'u8[8192]{0}', space=vmem, size = 0x2000, scoped, tag = 'input window, operand 1, single buffered']
    #allocation7 [shape = 's32[1]{0}', space=sflag, size = 0x4, scoped, tag = 'scoped memory for tpu_custom_call.1']
    #allocation8 [shape = 'u8[1024]{0}', space=vmem, size = 0x400, scoped, tag = 'input window, operand 2, single buffered']
    #allocation9 [shape = 'u8[1024]{0}', space=vmem, size = 0x400, scoped, tag = 'input window, operand 4, single buffered']
    #allocation10 [shape = 's32[1]{0}', space=sflag, size = 0x4, scoped, tag = 'scoped memory for tpu_custom_call.1']
    #allocation11 [shape = 'u8[1024]{0}', space=vmem, size = 0x400, scoped, tag = 'input window, operand 6, single buffered']
    #allocation12 [shape = 'u8[512]{0}', space=smem, size = 0x200, scoped, tag = 'output window, operand 0, single buffered']
    %13 = vsyncpa [#allocation4], 0
    %14 = vsyncpa [#allocation7], 0
    %15 = vsyncpa [#allocation10], 0
    %16 = vsyncpa [#allocation5], 0
    // Predicated region
    $region2: #{tpu_custom_call.1} parent=1 // pred_check
      _
    $region3: #{tpu_custom_call.1} parent=1 // pred_check_branch
      %18 = sbr.rel (0) target = $region5
    $region4: #{tpu_custom_call.1} parent=1 // pred_region
      %20 = vsyncadd [#allocation4], 0
      %s21 = sshll.u32 %s0, 4
      %s22 = int_to_ptr.hbm [resolvable:$true] %s21
      %s23 = sshll.u32 [#allocation3], 4
      %s24 = int_to_ptr.vmem [resolvable:$true] %s23
      %29 = dma.hbm_to_vmem [thread:$0]  %s22, 256, %s24, [#allocation4], 128, 128, 8
    $region5: #{tpu_custom_call.1} parent=1 // pred_fallthru
      _
    // Predicated region
    $region6: #{tpu_custom_call.1} parent=1 // pred_check
      _
    $region7: #{tpu_custom_call.1} parent=1 // pred_check_branch
      %31 = sbr.rel (0) target = $region9
    $region8: #{tpu_custom_call.1} parent=1 // pred_region
      %33 = vsyncadd [#allocation7], 0
      %s34 = sshll.u32 %s1, 4
      %s35 = int_to_ptr.hbm [resolvable:$true] %s34
      %s36 = sshll.u32 [#allocation6], 4
      %s37 = int_to_ptr.vmem [resolvable:$true] %s36
      %42 = dma.hbm_to_vmem [thread:$0]  %s35, 256, %s37, [#allocation7], 128, 128, 8
    $region9: #{tpu_custom_call.1} parent=1 // pred_fallthru
      _
    // Predicated region
    $region10: #{tpu_custom_call.1} parent=1 // pred_check
      _
    $region11: #{tpu_custom_call.1} parent=1 // pred_check_branch
      %44 = sbr.rel (0) target = $region13
    $region12: #{tpu_custom_call.1} parent=1 // pred_region
      %46 = vsyncadd [#allocation7], 0
      %s48 = sshll.u32 %s2, 4
      %s49 = int_to_ptr.hbm [resolvable:$true] %s48
      %s50 = sshll.u32 [#allocation8], 4
      %s51 = int_to_ptr.vmem [resolvable:$true] %s50
      %53 = dma.hbm_to_vmem [thread:$0]  %s49, 32, %s51, [#allocation7]
    $region13: #{tpu_custom_call.1} parent=1 // pred_fallthru
      _
    // Predicated region
    $region14: #{tpu_custom_call.1} parent=1 // pred_check
      _
    $region15: #{tpu_custom_call.1} parent=1 // pred_check_branch
      %55 = sbr.rel (0) target = $region17
    $region16: #{tpu_custom_call.1} parent=1 // pred_region
      _
    $region17: #{tpu_custom_call.1} parent=1 // pred_fallthru
      _
    // Predicated region
    $region18: #{tpu_custom_call.1} parent=1 // pred_check
      _
    $region19: #{tpu_custom_call.1} parent=1 // pred_check_branch
      %57 = sbr.rel (0) target = $region21
    $region20: #{tpu_custom_call.1} parent=1 // pred_region
      %59 = vsyncadd [#allocation10], 0
      %s61 = sshll.u32 %s4, 4
      %s62 = int_to_ptr.hbm [resolvable:$true] %s61
      %s63 = sshll.u32 [#allocation9], 4
      %s64 = int_to_ptr.vmem [resolvable:$true] %s63
      %66 = dma.hbm_to_vmem [thread:$0]  %s62, 32, %s64, [#allocation10]
    $region21: #{tpu_custom_call.1} parent=1 // pred_fallthru
      _
    // Predicated region
    $region22: #{tpu_custom_call.1} parent=1 // pred_check
      _
    $region23: #{tpu_custom_call.1} parent=1 // pred_check_branch
      %68 = sbr.rel (0) target = $region25
    $region24: #{tpu_custom_call.1} parent=1 // pred_region
      _
    $region25: #{tpu_custom_call.1} parent=1 // pred_fallthru
      _
    // Predicated region
    $region26: #{tpu_custom_call.1} parent=1 // pred_check
      _
    $region27: #{tpu_custom_call.1} parent=1 // pred_check_branch
      %70 = sbr.rel (0) target = $region29
    $region28: #{tpu_custom_call.1} parent=1 // pred_region
      %72 = vsyncadd [#allocation10], 0
      %s74 = sshll.u32 %s6, 4
      %s75 = int_to_ptr.hbm [resolvable:$true] %s74
      %s76 = sshll.u32 [#allocation11], 4
      %s77 = int_to_ptr.vmem [resolvable:$true] %s76
      %79 = dma.hbm_to_vmem [thread:$0]  %s75, 32, %s77, [#allocation10]
    $region29: #{tpu_custom_call.1} parent=1 // pred_fallthru
      _
    // Predicated region
    $region30: #{tpu_custom_call.1} parent=1 // pred_check
      _
    $region31: #{tpu_custom_call.1} parent=1 // pred_check_branch
      %81 = sbr.rel (0) target = $region33
    $region32: #{tpu_custom_call.1} parent=1 // pred_region
      _
    $region33: #{tpu_custom_call.1} parent=1 // pred_fallthru
      _
    // Predicated region
    $region34: #{tpu_custom_call.1} parent=1 // pred_check
      _
    $region35: #{tpu_custom_call.1} parent=1 // pred_check_branch
      %83 = sbr.rel (0) target = $region37
    $region36: #{tpu_custom_call.1} parent=1 // pred_region
      %85 = dma.done [#allocation4], 256
    $region37: #{tpu_custom_call.1} parent=1 // pred_fallthru
      _
    // Predicated region
    $region38: #{tpu_custom_call.1} parent=1 // pred_check
      _
    $region39: #{tpu_custom_call.1} parent=1 // pred_check_branch
      %87 = sbr.rel (0) target = $region41
    $region40: #{tpu_custom_call.1} parent=1 // pred_region
      %89 = dma.done [#allocation7], 256
    $region41: #{tpu_custom_call.1} parent=1 // pred_fallthru
      _
    // Predicated region
    $region42: #{tpu_custom_call.1} parent=1 // pred_check
      _
    $region43: #{tpu_custom_call.1} parent=1 // pred_check_branch
      %91 = sbr.rel (0) target = $region45
    $region44: #{tpu_custom_call.1} parent=1 // pred_region
      %93 = dma.done [#allocation7], 32
    $region45: #{tpu_custom_call.1} parent=1 // pred_fallthru
      _
    // Predicated region
    $region46: #{tpu_custom_call.1} parent=1 // pred_check
      _
    $region47: #{tpu_custom_call.1} parent=1 // pred_check_branch
      %95 = sbr.rel (0) target = $region49
    $region48: #{tpu_custom_call.1} parent=1 // pred_region
      %97 = dma.done [#allocation10], 32
    $region49: #{tpu_custom_call.1} parent=1 // pred_fallthru
      _
    // Predicated region
    $region50: #{tpu_custom_call.1} parent=1 // pred_check
      _
    $region51: #{tpu_custom_call.1} parent=1 // pred_check_branch
      %99 = sbr.rel (0) target = $region53
    $region52: #{tpu_custom_call.1} parent=1 // pred_region
      %101 = dma.done [#allocation10], 32
    $region53: #{tpu_custom_call.1} parent=1 // pred_fallthru
      _
    %p102 = scmp.eq.s32.totalorder 0, 0
    // Predicated region
    $region54: #{tpu_custom_call.1} parent=1 // pred_check
      %p103 = pneg %p102
    $region55: #{tpu_custom_call.1} parent=1 // pred_check_branch
      %105 = sbr.rel (%p103) target = $region57
    $region56: #{tpu_custom_call.1} parent=1 // pred_region
      %vm106 = vcmask 261120
      %107 = vst.msk [vmem:[#allocation2] sm:$0xff] %vm106, 0.0
    $region57: #{tpu_custom_call.1} parent=1 // pred_fallthru
      _
    %v108 = vld [vmem:[#allocation3] sm:$0xff]
    %v109 = vld [vmem:[#allocation3 + $0x8] sm:$0xff]
    %v110 = vld [vmem:[#allocation6] sm:$0xff]
    %v111 = vld [vmem:[#allocation6 + $0x8] sm:$0xff]
    %v112 = vsub.f32 %v108, %v110
    %v113 = vsub.f32 %v109, %v111
    %v114 = vmul.f32 %v112, %v112
    %v115 = vmul.f32 %v113, %v113
    %v116 = vld [vmem:[#allocation2] sm:$0xff]
    %vm117 = vcmask 261120
    %v118 = vsel %vm117, %v114, 0.0
    %v119 = vsel %vm117, %v115, 0.0
    %v120 = vadd.f32 %v118, %v119
    %v121 = vadd.f32 %v116, %v120
    %122 = vst.msk [vmem:[#allocation2] sm:$0xff] %vm117, %v121
    // Predicated region
    $region58: #{tpu_custom_call.1} parent=1 // pred_check
      %p123 = pneg %p102
    $region59: #{tpu_custom_call.1} parent=1 // pred_check_branch
      %125 = sbr.rel (%p123) target = $region61
    $region60: #{tpu_custom_call.1} parent=1 // pred_region
      %v126 = vld [vmem:[#allocation2] sm:$0xff]
      %v127 = vsel %vm117, %v126, 0.0
      %128 = vadd.xlane.f32.xlu0 %v127
      %v129 = vpop.xlane.xlu0 %128
      %v130 = vrot.slane %v129, 4
      %v131 = vadd.f32 %v129, %v130
      %v132 = vrot.slane %v131, 2
      %v133 = vadd.f32 %v131, %v132
      %v134 = vrot.slane %v133, 1
      %v135 = vadd.f32 %v133, %v134
      %s136 = vtos %v135
      %v137 = vrcp.pop 512.0
      %v138 = vmul.f32 512.0, %v137
      %v139 = vsub.f32 1.0, %v138
      %v140 = vmul.f32 %v137, %v139
      %v141 = vadd.f32 %v137, %v140
      %vm142 = vweird.f32 %v137
      %v143 = vsel %vm142, %v137, %v141
      %s144 = vtos %v143
      %s145 = smul.f32 %s136, %s144
      %s146 = scalar_lea.smem [#allocation12], 0
      %147 = sst [smem:[%s146]] %s145
      %v148 = vld [vmem:[#allocation8] sm:$0x3]
      %v149 = vld [vmem:[%s3] sm:$0x3]
      %v150 = vsub.f32 %v148, %v149
      %v151 = vand.u32 2147483647, %v150
      %vm152 = vcmask 58368
      %v153 = vsel %vm152, %v151, 0.0
      %154 = vadd.xlane.f32.xlu0 %v153
      %v155 = vpop.xlane.xlu0 %154
      %v156 = vrot.slane %v155, 4
      %v157 = vadd.f32 %v155, %v156
      %v158 = vrot.slane %v157, 2
      %v159 = vadd.f32 %v157, %v158
      %v160 = vrot.slane %v159, 1
      %v161 = vadd.f32 %v159, %v160
      %s162 = vtos %v161
      %v163 = vrcp.pop 16.0
      %v164 = vmul.f32 16.0, %v163
      %v165 = vsub.f32 1.0, %v164
      %v166 = vmul.f32 %v163, %v165
      %v167 = vadd.f32 %v163, %v166
      %vm168 = vweird.f32 %v163
      %v169 = vsel %vm168, %v163, %v167
      %s170 = vtos %v169
      %s171 = smul.f32 %s162, %s170
      %s172 = scalar_lea.smem [#allocation12], 1
      %173 = sst [smem:[%s172]] %s171
      %v174 = vld [vmem:[#allocation9] sm:$0x3]
      %v175 = vld [vmem:[%s5] sm:$0x3]
      %v176 = vsub.f32 %v174, %v175
      %v177 = vand.u32 2147483647, %v176
      %v178 = vsel %vm152, %v177, 0.0
      %179 = vadd.xlane.f32.xlu0 %v178
      %v180 = vpop.xlane.xlu0 %179
      %v181 = vrot.slane %v180, 4
      %v182 = vadd.f32 %v180, %v181
      %v183 = vrot.slane %v182, 2
      %v184 = vadd.f32 %v182, %v183
      %v185 = vrot.slane %v184, 1
      %v186 = vadd.f32 %v184, %v185
      %s187 = vtos %v186
      %v188 = vrcp.pop 16.0
      %v189 = vmul.f32 16.0, %v188
      %v190 = vsub.f32 1.0, %v189
      %v191 = vmul.f32 %v188, %v190
      %v192 = vadd.f32 %v188, %v191
      %vm193 = vweird.f32 %v188
      %v194 = vsel %vm193, %v188, %v192
      %s195 = vtos %v194
      %s196 = smul.f32 %s187, %s195
      %s197 = scalar_lea.smem [#allocation12], 2
      %198 = sst [smem:[%s197]] %s196
      %v199 = vld [vmem:[#allocation11] sm:$0x3]
      %v200 = vld [vmem:[%s7] sm:$0x3]
      %v201 = vcvt.s32.f32 %v200
      %v202 = vsub.f32 %v199, %v201
      %v203 = vand.u32 2147483647, %v202
      %v204 = vsel %vm152, %v203, 0.0
      %205 = vadd.xlane.f32.xlu0 %v204
      %v206 = vpop.xlane.xlu0 %205
      %v207 = vrot.slane %v206, 4
      %v208 = vadd.f32 %v206, %v207
      %v209 = vrot.slane %v208, 2
      %v210 = vadd.f32 %v208, %v209
      %v211 = vrot.slane %v210, 1
      %v212 = vadd.f32 %v210, %v211
      %s213 = vtos %v212
      %v214 = vrcp.pop 16.0
      %v215 = vmul.f32 16.0, %v214
      %v216 = vsub.f32 1.0, %v215
      %v217 = vmul.f32 %v214, %v216
      %v218 = vadd.f32 %v214, %v217
      %vm219 = vweird.f32 %v214
      %v220 = vsel %vm219, %v214, %v218
      %s221 = vtos %v220
      %s222 = smul.f32 %s213, %s221
      %s223 = scalar_lea.smem [#allocation12], 3
      %224 = sst [smem:[%s223]] %s222
    $region61: #{tpu_custom_call.1} parent=1 // pred_fallthru
      _
    // Predicated region
    $region62: #{tpu_custom_call.1} parent=1 // pred_check
      _
    $region63: #{tpu_custom_call.1} parent=1 // pred_check_branch
      %226 = sbr.rel (0) target = $region65
    $region64: #{tpu_custom_call.1} parent=1 // pred_region
      %228 = vsyncadd [#allocation5], 0
      %s230 = sshll.u32 %s8, 4
      %s231 = int_to_ptr.hbm [resolvable:$true] %s230
      %233 = dma.smem_to_hbm [#allocation12], 16, %s231, [#allocation5]
    $region65: #{tpu_custom_call.1} parent=1 // pred_fallthru
      _
    // Predicated region
    $region66: #{tpu_custom_call.1} parent=1 // pred_check
      _
    $region67: #{tpu_custom_call.1} parent=1 // pred_check_branch
      %235 = sbr.rel (0) target = $region69
    $region68: #{tpu_custom_call.1} parent=1 // pred_region
      %237 = dma.done [#allocation5], 16
    $region69: #{tpu_custom_call.1} parent=1 // pred_fallthru
      _
    %238 = sfence
    %239 = vsyncpa [#allocation4], 1
    %240 = vsyncpa [#allocation7], 1
    %241 = vsyncpa [#allocation10], 1
    %242 = vsyncpa [#allocation5], 1

</llo_original>
